<compile_context>
chip_gen: v5e
topology: v5e:2x2
jax: 0.10.0
libtpu: 0.0.40
codegen_flags: <defaults>
</compile_context>

<pallas_src>
import functools

import jax
import jax.numpy as jnp
from jax import lax
from jax.experimental import pallas as pl
from jax.experimental.pallas import tpu as pltpu

INPUT_SIZE = 784
NUM_CLASSES = 10
LANE = 128
TINY_BATCH = 256          # <= this: no-grid latency path (everything resident in VMEM)
DEFAULT_BLOCK_B = 1024    # fits v5e 16 MiB scoped VMEM double-buffered; fine on v6e/v7x


def _round_up(x, m):
    return ((x + m - 1) // m) * m


def linear_kernel(x_ref, w_ref, b_ref, o_ref):
    # x: [TB, K], w: [N_pad, K] (NOT transposed), b: [1, N_pad] f32.
    # Contract over K on the MXU, accumulate in f32, add bias in f32.
    x = x_ref[...]
    w = w_ref[...]
    if w.dtype != x.dtype:
        # Narrow-storage weight (e.g. bf16) is up-cast once in VMEM (cheap VPU op);
        # the HBM transfer of the weight was already done at the narrow width.
        tgt = jnp.promote_types(x.dtype, w.dtype)
        x = x.astype(tgt)
        w = w.astype(tgt)
    acc = lax.dot_general(
        x,
        w,
        dimension_numbers=(((1,), (1,)), ((), ())),
        preferred_element_type=jnp.float32,
    )
    o_ref[...] = (acc + b_ref[...]).astype(o_ref.dtype)


@functools.partial(jax.jit, static_argnames=("block_b", "weight_dtype"))
def logistic_regression_forward(x, weight, bias, *, block_b=DEFAULT_BLOCK_B,
                                weight_dtype=None):
    """x: [B, K], weight: [N, K], bias: [N] -> [B, N] (dtype of x).

    weight_dtype: optional narrow storage dtype for the weight transfer
    (e.g. jnp.bfloat16); accumulation and bias add remain f32.
    """
    B, K = x.shape
    N = weight.shape[0]
    n_pad = max(LANE, _round_up(N, LANE))   # lane-dense class dim (exactly 128 here)

    # Pad class dim with zeros; keep weight as [N_pad, K] (no transpose).
    w_p = jnp.pad(weight, ((0, n_pad - N), (0, 0)))
    if weight_dtype is not None:
        w_p = w_p.astype(weight_dtype)
    b_p = jnp.pad(bias, (0, n_pad - N)).reshape(1, n_pad).astype(jnp.float32)

    out_dtype = x.dtype
    cost = pl.CostEstimate(
        flops=2 * B * K * n_pad,
        transcendentals=0,
        bytes_accessed=int(
            x.size * x.dtype.itemsize
            + w_p.size * w_p.dtype.itemsize
            + b_p.size * b_p.dtype.itemsize
            + B * n_pad * jnp.dtype(out_dtype).itemsize
        ),
    )

    if B <= TINY_BATCH:
        # Tiny batch: no grid, whole arrays resident in VMEM (pure latency path).
        out = pl.pallas_call(
            linear_kernel,
            out_shape=jax.ShapeDtypeStruct((B, n_pad), out_dtype),
            in_specs=[
                pl.BlockSpec(memory_space=pltpu.MemorySpace.VMEM),
                pl.BlockSpec(memory_space=pltpu.MemorySpace.VMEM),
                pl.BlockSpec(memory_space=pltpu.MemorySpace.VMEM),
            ],
            out_specs=pl.BlockSpec(memory_space=pltpu.MemorySpace.VMEM),
            cost_estimate=cost,
        )(x, w_p, b_p)
    else:
        # Large batch: stream x in blk-row tiles; weight/bias stay resident.
        # Adaptive block so the grid has >= 2 steps (lets the "parallel" axis
        # shard across both v7x TensorCores; no-op on single-TC v5e/v6e).
        blk = min(block_b, _round_up(pl.cdiv(B, 2), 8))
        blk = max(blk, 8)
        nb = pl.cdiv(B, blk)
        # NOTE: B need not be a multiple of blk — the Pallas TPU pipeline masks
        # the ragged last block; no wrapper-side pad / slice of x or the output.
        out = pl.pallas_call(
            linear_kernel,
            out_shape=jax.ShapeDtypeStruct((B, n_pad), out_dtype),
            grid_spec=pltpu.PrefetchScalarGridSpec(
                num_scalar_prefetch=0,
                grid=(nb,),
                in_specs=[
                    pl.BlockSpec((blk, K), lambda i: (i, 0)),
                    pl.BlockSpec((n_pad, K), lambda i: (0, 0)),
                    pl.BlockSpec((1, n_pad), lambda i: (0, 0)),
                ],
                out_specs=pl.BlockSpec((blk, n_pad), lambda i: (i, 0)),
            ),
            compiler_params=pltpu.CompilerParams(
                dimension_semantics=("parallel",),  # megacore sharding on v7x
            ),
            cost_estimate=cost,
        )(x, w_p, b_p)

    # Slice the zero-padded classes back to the module's [B, N] output.
    return out[:, :N]


if __name__ == "__main__":
    key = jax.random.PRNGKey(0)
    k_x, k_w, k_b, k_x2 = jax.random.split(key, 4)

    B = 8
    x = jax.random.normal(k_x, (B, INPUT_SIZE), dtype=jnp.float32)

    # Deterministic parameter init mimicking nn.Linear default (uniform +-1/sqrt(in)).
    bound = 1.0 / (INPUT_SIZE ** 0.5)
    weight = jax.random.uniform(
        k_w, (NUM_CLASSES, INPUT_SIZE), dtype=jnp.float32, minval=-bound, maxval=bound
    )
    bias = jax.random.uniform(
        k_b, (NUM_CLASSES,), dtype=jnp.float32, minval=-bound, maxval=bound
    )

    ref = x @ weight.T + bias

    # 1) f32 latency path (no grid, everything resident in VMEM) -- exact semantics.
    out = logistic_regression_forward(x, weight, bias)
    jax.block_until_ready(out)
    assert out.shape == (B, NUM_CLASSES)
    assert jnp.allclose(out, ref, atol=1e-4, rtol=1e-4)

    # 2) bf16 weight transfer (halves the dominant HBM read at tiny batch),
    #    f32 accumulation -> looser tolerance from weight quantization only.
    out_bf16w = logistic_regression_forward(x, weight, bias, weight_dtype=jnp.bfloat16)
    jax.block_until_ready(out_bf16w)
    assert jnp.allclose(out_bf16w, ref, atol=5e-2, rtol=5e-2)

    # 3) Batch-tiled path with a ragged last block (B not a multiple of blk),
    #    handled by the pipeline -- no wrapper pad/slice of x.
    B2 = 1040
    x2 = jax.random.normal(k_x2, (B2, INPUT_SIZE), dtype=jnp.float32)
    ref2 = x2 @ weight.T + bias
    out2 = logistic_regression_forward(x2, weight, bias, block_b=512)   # blk=512, nb=3 (last block 16 rows)
    jax.block_until_ready(out2)
    assert out2.shape == (B2, NUM_CLASSES)
    assert jnp.allclose(out2, ref2, atol=1e-4, rtol=1e-4)

    # 4) Default (adaptive) block: blk=520, nb=2 -> both v7x TCs get work.
    out3 = logistic_regression_forward(x2, weight, bias)
    jax.block_until_ready(out3)
    assert jnp.allclose(out3, ref2, atol=1e-4, rtol=1e-4)

    print("KERNEL_OK")
</pallas_src>

<mosaic_0001>
module attributes {stable_mosaic.version = 11 : i64} {
  func.func @linear_kernel(%arg0: memref<8x784xf32, #tpu.memory_space<vmem>>, %arg1: memref<128x784xf32, #tpu.memory_space<vmem>>, %arg2: memref<1x128xf32, #tpu.memory_space<vmem>>, %arg3: memref<8x128xf32, #tpu.memory_space<vmem>>) attributes {dimension_semantics = [], scalar_prefetch = 0 : i64, scratch_operands = 0 : i64, tpu.core_type = #tpu.core_type<tc>} {
    %c0 = arith.constant 0 : index
    %c0_0 = arith.constant 0 : index
    %0 = vector.load %arg0[%c0, %c0_0] : memref<8x784xf32, #tpu.memory_space<vmem>>, vector<8x784xf32>
    %c0_1 = arith.constant 0 : index
    %c0_2 = arith.constant 0 : index
    %1 = vector.load %arg1[%c0_1, %c0_2] : memref<128x784xf32, #tpu.memory_space<vmem>>, vector<128x784xf32>
    %cst = arith.constant dense<0.000000e+00> : vector<8x128xf32>
    %2 = tpu.matmul %0, %1, %cst {dimension_numbers = #tpu.dot_dimension_numbers<[1], [1], [0], [0], [0, 0, 1, 0], [], []>} : vector<8x784xf32>, vector<128x784xf32>, vector<8x128xf32> -> vector<8x128xf32>
    %c0_3 = arith.constant 0 : index
    %c0_4 = arith.constant 0 : index
    %3 = vector.load %arg2[%c0_3, %c0_4] : memref<1x128xf32, #tpu.memory_space<vmem>>, vector<1x128xf32>
    %4 = vector.broadcast %3 : vector<1x128xf32> to vector<8x128xf32>
    %5 = arith.addf %2, %4 : vector<8x128xf32>
    %c0_5 = arith.constant 0 : index
    %c0_6 = arith.constant 0 : index
    %6 = vector.load %arg3[%c0_5, %c0_6] : memref<8x128xf32, #tpu.memory_space<vmem>>, vector<8x128xf32>
    tpu.vector_store %arg3[%c0_5, %c0_6], %5 {strides = array<i32>} : memref<8x128xf32, #tpu.memory_space<vmem>>, vector<8x128xf32>,
    return
  }
}

</mosaic_0001>

<llo_original>
// kernel: logistic_regression_forward.1
$region0: #{logistic_regression_forward.1}
  #allocation0 [shape = 'u32[]', space=smem, size = 0x4, offset = 0x4, fixed_abs, tag = 'smem constant byte address 0x4 - core index']
  #allocation1 [shape = 'u32[72,128]{1,0:T(1,128)}', space=vmem, size = 0x9000, scoped, tag = 'internal scratch']
  %s0 = inlined_call_operand.vmem [shape: f32[8,784], index: 0, kind: input, shape index: {}]
  %s1 = inlined_call_operand.vmem [shape: f32[128,784], index: 1, kind: input, shape index: {}]
  %s2 = inlined_call_operand.vmem [shape: f32[1,128], index: 2, kind: input, shape index: {}]
  %s3 = inlined_call_operand.hbm [shape: f32[8,128], index: 3, kind: output, shape index: {}]
  %s4 = sld [smem:[#allocation0]]
  $region22: #{logistic_regression_forward.1} parent=0
    _
  %s6 = ssub.s32 1, %s4
  %s7 = scalar_select 0, %s6, %s4
  $region1: #{logistic_regression_forward.1} parent=0
    #allocation2 [shape = 'u8[4096]{0}', space=vmem, size = 0x1000, scoped, tag = 'output window, operand 0, single buffered']
    #allocation3 [shape = 's32[1]{0}', space=sflag, size = 0x4, scoped, tag = 'scoped memory for logistic_regression_forward.1']
    %8 = vsyncpa [#allocation3], 0
    // Predicated region
    $region2: #{logistic_regression_forward.1} parent=1 // pred_check
      _
    $region3: #{logistic_regression_forward.1} parent=1 // pred_check_branch
      %10 = sbr.rel (0) target = $region5
    $region4: #{logistic_regression_forward.1} parent=1 // pred_region
      _
    $region5: #{logistic_regression_forward.1} parent=1 // pred_fallthru
      _
    // Predicated region
    $region6: #{logistic_regression_forward.1} parent=1 // pred_check
      _
    $region7: #{logistic_regression_forward.1} parent=1 // pred_check_branch
      %12 = sbr.rel (0) target = $region9
    $region8: #{logistic_regression_forward.1} parent=1 // pred_region
      _
    $region9: #{logistic_regression_forward.1} parent=1 // pred_fallthru
      _
    // Predicated region
    $region10: #{logistic_regression_forward.1} parent=1 // pred_check
      _
    $region11: #{logistic_regression_forward.1} parent=1 // pred_check_branch
      %14 = sbr.rel (0) target = $region13
    $region12: #{logistic_regression_forward.1} parent=1 // pred_region
      _
    $region13: #{logistic_regression_forward.1} parent=1 // pred_fallthru
      _
    %v15 = vld [vmem:[%s0] sm:$0xff]
    %v16 = vld [vmem:[%s0 + $0x8] sm:$0xff]
    %v17 = vld [vmem:[%s0 + $0x10] sm:$0xff]
    %v18 = vld [vmem:[%s0 + $0x18] sm:$0xff]
    %v19 = vld [vmem:[%s0 + $0x20] sm:$0xff]
    %v20 = vld [vmem:[%s0 + $0x28] sm:$0xff]
    %v21 = vld [vmem:[%s0 + $0x30] sm:$0xff]
    %v22 = vld [vmem:[%s1] sm:$0xff]
    %v23 = vld [vmem:[%s1 + $0x8] sm:$0xff]
    %v24 = vld [vmem:[%s1 + $0x10] sm:$0xff]
    %v25 = vld [vmem:[%s1 + $0x18] sm:$0xff]
    %v26 = vld [vmem:[%s1 + $0x20] sm:$0xff]
    %v27 = vld [vmem:[%s1 + $0x28] sm:$0xff]
    %v28 = vld [vmem:[%s1 + $0x30] sm:$0xff]
    %v29 = vld [vmem:[%s1 + $0x38] sm:$0xff]
    %v30 = vld [vmem:[%s1 + $0x40] sm:$0xff]
    %v31 = vld [vmem:[%s1 + $0x48] sm:$0xff]
    %v32 = vld [vmem:[%s1 + $0x50] sm:$0xff]
    %v33 = vld [vmem:[%s1 + $0x58] sm:$0xff]
    %v34 = vld [vmem:[%s1 + $0x60] sm:$0xff]
    %v35 = vld [vmem:[%s1 + $0x68] sm:$0xff]
    %v36 = vld [vmem:[%s1 + $0x70] sm:$0xff]
    %v37 = vld [vmem:[%s1 + $0x78] sm:$0xff]
    %v38 = vld [vmem:[%s1 + $0x80] sm:$0xff]
    %v39 = vld [vmem:[%s1 + $0x88] sm:$0xff]
    %v40 = vld [vmem:[%s1 + $0x90] sm:$0xff]
    %v41 = vld [vmem:[%s1 + $0x98] sm:$0xff]
    %v42 = vld [vmem:[%s1 + $0xa0] sm:$0xff]
    %v43 = vld [vmem:[%s1 + $0xa8] sm:$0xff]
    %v44 = vld [vmem:[%s1 + $0xb0] sm:$0xff]
    %v45 = vld [vmem:[%s1 + $0xb8] sm:$0xff]
    %v46 = vld [vmem:[%s1 + $0xc0] sm:$0xff]
    %v47 = vld [vmem:[%s1 + $0xc8] sm:$0xff]
    %v48 = vld [vmem:[%s1 + $0xd0] sm:$0xff]
    %v49 = vld [vmem:[%s1 + $0xd8] sm:$0xff]
    %v50 = vld [vmem:[%s1 + $0xe0] sm:$0xff]
    %v51 = vld [vmem:[%s1 + $0xe8] sm:$0xff]
    %v52 = vld [vmem:[%s1 + $0xf0] sm:$0xff]
    %v53 = vld [vmem:[%s1 + $0xf8] sm:$0xff]
    %v54 = vld [vmem:[%s1 + $0x100] sm:$0xff]
    %v55 = vld [vmem:[%s1 + $0x108] sm:$0xff]
    %v56 = vld [vmem:[%s1 + $0x110] sm:$0xff]
    %v57 = vld [vmem:[%s1 + $0x118] sm:$0xff]
    %v58 = vld [vmem:[%s1 + $0x120] sm:$0xff]
    %v59 = vld [vmem:[%s1 + $0x128] sm:$0xff]
    %v60 = vld [vmem:[%s1 + $0x130] sm:$0xff]
    %v61 = vld [vmem:[%s1 + $0x138] sm:$0xff]
    %v62 = vld [vmem:[%s1 + $0x140] sm:$0xff]
    %v63 = vld [vmem:[%s1 + $0x148] sm:$0xff]
    %v64 = vld [vmem:[%s1 + $0x150] sm:$0xff]
    %v65 = vld [vmem:[%s1 + $0x158] sm:$0xff]
    %v66 = vld [vmem:[%s1 + $0x160] sm:$0xff]
    %v67 = vld [vmem:[%s1 + $0x168] sm:$0xff]
    %v68 = vld [vmem:[%s1 + $0x170] sm:$0xff]
    %v69 = vld [vmem:[%s1 + $0x178] sm:$0xff]
    %v70 = vld [vmem:[%s1 + $0x180] sm:$0xff]
    %v71 = vld [vmem:[%s1 + $0x188] sm:$0xff]
    %v72 = vld [vmem:[%s1 + $0x190] sm:$0xff]
    %v73 = vld [vmem:[%s1 + $0x198] sm:$0xff]
    %v74 = vld [vmem:[%s1 + $0x1a0] sm:$0xff]
    %v75 = vld [vmem:[%s1 + $0x1a8] sm:$0xff]
    %v76 = vld [vmem:[%s1 + $0x1b0] sm:$0xff]
    %v77 = vld [vmem:[%s1 + $0x1b8] sm:$0xff]
    %v78 = vld [vmem:[%s1 + $0x1c0] sm:$0xff]
    %v79 = vld [vmem:[%s1 + $0x1c8] sm:$0xff]
    %v80 = vld [vmem:[%s1 + $0x1d0] sm:$0xff]
    %v81 = vld [vmem:[%s1 + $0x1d8] sm:$0xff]
    %v82 = vld [vmem:[%s1 + $0x1e0] sm:$0xff]
    %v83 = vld [vmem:[%s1 + $0x1e8] sm:$0xff]
    %v84 = vld [vmem:[%s1 + $0x1f0] sm:$0xff]
    %v85 = vld [vmem:[%s1 + $0x1f8] sm:$0xff]
    %v86 = vld [vmem:[%s1 + $0x200] sm:$0xff]
    %v87 = vld [vmem:[%s1 + $0x208] sm:$0xff]
    %v88 = vld [vmem:[%s1 + $0x210] sm:$0xff]
    %v89 = vld [vmem:[%s1 + $0x218] sm:$0xff]
    %v90 = vld [vmem:[%s1 + $0x220] sm:$0xff]
    %v91 = vld [vmem:[%s1 + $0x228] sm:$0xff]
    %v92 = vld [vmem:[%s1 + $0x230] sm:$0xff]
    %v93 = vld [vmem:[%s1 + $0x238] sm:$0xff]
    %v94 = vld [vmem:[%s1 + $0x240] sm:$0xff]
    %v95 = vld [vmem:[%s1 + $0x248] sm:$0xff]
    %v96 = vld [vmem:[%s1 + $0x250] sm:$0xff]
    %v97 = vld [vmem:[%s1 + $0x258] sm:$0xff]
    %v98 = vld [vmem:[%s1 + $0x260] sm:$0xff]
    %v99 = vld [vmem:[%s1 + $0x268] sm:$0xff]
    %v100 = vld [vmem:[%s1 + $0x270] sm:$0xff]
    %v101 = vld [vmem:[%s1 + $0x278] sm:$0xff]
    %v102 = vld [vmem:[%s1 + $0x280] sm:$0xff]
    %v103 = vld [vmem:[%s1 + $0x288] sm:$0xff]
    %v104 = vld [vmem:[%s1 + $0x290] sm:$0xff]
    %v105 = vld [vmem:[%s1 + $0x298] sm:$0xff]
    %v106 = vld [vmem:[%s1 + $0x2a0] sm:$0xff]
    %v107 = vld [vmem:[%s1 + $0x2a8] sm:$0xff]
    %v108 = vld [vmem:[%s1 + $0x2b0] sm:$0xff]
    %v109 = vld [vmem:[%s1 + $0x2b8] sm:$0xff]
    %v110 = vld [vmem:[%s1 + $0x2c0] sm:$0xff]
    %v111 = vld [vmem:[%s1 + $0x2c8] sm:$0xff]
    %v112 = vld [vmem:[%s1 + $0x2d0] sm:$0xff]
    %v113 = vld [vmem:[%s1 + $0x2d8] sm:$0xff]
    %v114 = vld [vmem:[%s1 + $0x2e0] sm:$0xff]
    %v115 = vld [vmem:[%s1 + $0x2e8] sm:$0xff]
    %v116 = vld [vmem:[%s1 + $0x2f0] sm:$0xff]
    %v117 = vld [vmem:[%s1 + $0x2f8] sm:$0xff]
    %v118 = vld [vmem:[%s1 + $0x300] sm:$0xff]
    %v119 = vld [vmem:[%s1 + $0x308] sm:$0xff]
    %v120 = vld [vmem:[%s1 + $0x310] sm:$0xff]
    %v121 = vld [vmem:[%s1 + $0x318] sm:$0xff]
    %v122 = vld [vmem:[%s1 + $0x320] sm:$0xff]
    %v123 = vld [vmem:[%s1 + $0x328] sm:$0xff]
    %v124 = vld [vmem:[%s1 + $0x330] sm:$0xff]
    %v125 = vld [vmem:[%s1 + $0x338] sm:$0xff]
    %v126 = vld [vmem:[%s1 + $0x340] sm:$0xff]
    %v127 = vld [vmem:[%s1 + $0x348] sm:$0xff]
    %v128 = vld [vmem:[%s1 + $0x350] sm:$0xff]
    %v129 = vld [vmem:[%s1 + $0x358] sm:$0xff]
    %v130 = vld [vmem:[%s1 + $0x360] sm:$0xff]
    %v131 = vld [vmem:[%s1 + $0x368] sm:$0xff]
    %v132 = vld [vmem:[%s1 + $0x370] sm:$0xff]
    %v133 = vld [vmem:[%s1 + $0x378] sm:$0xff]
    %v134 = vld [vmem:[%s2] sm:$0x1]
    %v136 = vperm.slane %v134, 0
    %vm138 = vcmask 130048
    %v140 = vsel %vm138, %v21, 0
    %v143 = vsel %vm138, %v28, 0
    %v146 = vsel %vm138, %v35, 0
    %v149 = vsel %vm138, %v42, 0
    %v152 = vsel %vm138, %v49, 0
    %v155 = vsel %vm138, %v56, 0
    %v158 = vsel %vm138, %v63, 0
    %v161 = vsel %vm138, %v70, 0
    %v164 = vsel %vm138, %v77, 0
    %v167 = vsel %vm138, %v84, 0
    %v170 = vsel %vm138, %v91, 0
    %v173 = vsel %vm138, %v98, 0
    %v176 = vsel %vm138, %v105, 0
    %v179 = vsel %vm138, %v112, 0
    %v182 = vsel %vm138, %v119, 0
    %v185 = vsel %vm138, %v126, 0
    %v188 = vsel %vm138, %v133, 0
    %190 = vmatpush.xpose.msra.mxu0 %v127
    %191 = vmatpush.xpose.msra.mxu0 %v120
    %192 = vmatpush.xpose.msra.mxu0 %v113
    %193 = vmatpush.xpose.msra.mxu0 %v106
    %194 = vmatpush.xpose.msra.mxu0 %v99
    %195 = vmatpush.xpose.msra.mxu0 %v92
    %196 = vmatpush.xpose.msra.mxu0 %v85
    %197 = vmatpush.xpose.msra.mxu0 %v78
    %198 = vmatpush.xpose.msra.mxu0 %v71
    %199 = vmatpush.xpose.msra.mxu0 %v64
    %200 = vmatpush.xpose.msra.mxu0 %v57
    %201 = vmatpush.xpose.msra.mxu0 %v50
    %202 = vmatpush.xpose.msra.mxu0 %v43
    %203 = vmatpush.xpose.msra.mxu0 %v36
    %204 = vmatpush.xpose.msra.mxu0 %v29
    %205 = vmatpush.xpose.msra.mxu0 %v22
    %206 = vmatmul.f32.gmra.mxu0 %v15
    %v207 = vpop.f32.mrf.mxu0
    %v208 = vadd.f32 %v136, %v207
    %209 = vdwg.mxu0
    %210 = vmatpush.xpose.msra.mxu0 %v128
    %211 = vmatpush.xpose.msra.mxu0 %v121
    %212 = vmatpush.xpose.msra.mxu0 %v114
    %213 = vmatpush.xpose.msra.mxu0 %v107
    %214 = vmatpush.xpose.msra.mxu0 %v100
    %215 = vmatpush.xpose.msra.mxu0 %v93
    %216 = vmatpush.xpose.msra.mxu0 %v86
    %217 = vmatpush.xpose.msra.mxu0 %v79
    %218 = vmatpush.xpose.msra.mxu0 %v72
    %219 = vmatpush.xpose.msra.mxu0 %v65
    %220 = vmatpush.xpose.msra.mxu0 %v58
    %221 = vmatpush.xpose.msra.mxu0 %v51
    %222 = vmatpush.xpose.msra.mxu0 %v44
    %223 = vmatpush.xpose.msra.mxu0 %v37
    %224 = vmatpush.xpose.msra.mxu0 %v30
    %225 = vmatpush.xpose.msra.mxu0 %v23
    %226 = vmatmul.f32.gmra.mxu0 %v16
    %v227 = vpop.f32.mrf.mxu0
    %v228 = vadd.f32 %v208, %v227
    %229 = vdwg.mxu0
    %230 = vmatpush.xpose.msra.mxu0 %v129
    %231 = vmatpush.xpose.msra.mxu0 %v122
    %232 = vmatpush.xpose.msra.mxu0 %v115
    %233 = vmatpush.xpose.msra.mxu0 %v108
    %234 = vmatpush.xpose.msra.mxu0 %v101
    %235 = vmatpush.xpose.msra.mxu0 %v94
    %236 = vmatpush.xpose.msra.mxu0 %v87
    %237 = vmatpush.xpose.msra.mxu0 %v80
    %238 = vmatpush.xpose.msra.mxu0 %v73
    %239 = vmatpush.xpose.msra.mxu0 %v66
    %240 = vmatpush.xpose.msra.mxu0 %v59
    %241 = vmatpush.xpose.msra.mxu0 %v52
    %242 = vmatpush.xpose.msra.mxu0 %v45
    %243 = vmatpush.xpose.msra.mxu0 %v38
    %244 = vmatpush.xpose.msra.mxu0 %v31
    %245 = vmatpush.xpose.msra.mxu0 %v24
    %246 = vmatmul.f32.gmra.mxu0 %v17
    %v247 = vpop.f32.mrf.mxu0
    %v248 = vadd.f32 %v228, %v247
    %249 = vdwg.mxu0
    %250 = vmatpush.xpose.msra.mxu0 %v130
    %251 = vmatpush.xpose.msra.mxu0 %v123
    %252 = vmatpush.xpose.msra.mxu0 %v116
    %253 = vmatpush.xpose.msra.mxu0 %v109
    %254 = vmatpush.xpose.msra.mxu0 %v102
    %255 = vmatpush.xpose.msra.mxu0 %v95
    %256 = vmatpush.xpose.msra.mxu0 %v88
    %257 = vmatpush.xpose.msra.mxu0 %v81
    %258 = vmatpush.xpose.msra.mxu0 %v74
    %259 = vmatpush.xpose.msra.mxu0 %v67
    %260 = vmatpush.xpose.msra.mxu0 %v60
    %261 = vmatpush.xpose.msra.mxu0 %v53
    %262 = vmatpush.xpose.msra.mxu0 %v46
    %263 = vmatpush.xpose.msra.mxu0 %v39
    %264 = vmatpush.xpose.msra.mxu0 %v32
    %265 = vmatpush.xpose.msra.mxu0 %v25
    %266 = vmatmul.f32.gmra.mxu0 %v18
    %v267 = vpop.f32.mrf.mxu0
    %v268 = vadd.f32 %v248, %v267
    %269 = vdwg.mxu0
    %270 = vmatpush.xpose.msra.mxu0 %v131
    %271 = vmatpush.xpose.msra.mxu0 %v124
    %272 = vmatpush.xpose.msra.mxu0 %v117
    %273 = vmatpush.xpose.msra.mxu0 %v110
    %274 = vmatpush.xpose.msra.mxu0 %v103
    %275 = vmatpush.xpose.msra.mxu0 %v96
    %276 = vmatpush.xpose.msra.mxu0 %v89
    %277 = vmatpush.xpose.msra.mxu0 %v82
    %278 = vmatpush.xpose.msra.mxu0 %v75
    %279 = vmatpush.xpose.msra.mxu0 %v68
    %280 = vmatpush.xpose.msra.mxu0 %v61
    %281 = vmatpush.xpose.msra.mxu0 %v54
    %282 = vmatpush.xpose.msra.mxu0 %v47
    %283 = vmatpush.xpose.msra.mxu0 %v40
    %284 = vmatpush.xpose.msra.mxu0 %v33
    %285 = vmatpush.xpose.msra.mxu0 %v26
    %286 = vmatmul.f32.gmra.mxu0 %v19
    %v287 = vpop.f32.mrf.mxu0
    %v288 = vadd.f32 %v268, %v287
    %289 = vdwg.mxu0
    %290 = vmatpush.xpose.msra.mxu0 %v132
    %291 = vmatpush.xpose.msra.mxu0 %v125
    %292 = vmatpush.xpose.msra.mxu0 %v118
    %293 = vmatpush.xpose.msra.mxu0 %v111
    %294 = vmatpush.xpose.msra.mxu0 %v104
    %295 = vmatpush.xpose.msra.mxu0 %v97
    %296 = vmatpush.xpose.msra.mxu0 %v90
    %297 = vmatpush.xpose.msra.mxu0 %v83
    %298 = vmatpush.xpose.msra.mxu0 %v76
    %299 = vmatpush.xpose.msra.mxu0 %v69
    %300 = vmatpush.xpose.msra.mxu0 %v62
    %301 = vmatpush.xpose.msra.mxu0 %v55
    %302 = vmatpush.xpose.msra.mxu0 %v48
    %303 = vmatpush.xpose.msra.mxu0 %v41
    %304 = vmatpush.xpose.msra.mxu0 %v34
    %305 = vmatpush.xpose.msra.mxu0 %v27
    %306 = vmatmul.f32.gmra.mxu0 %v20
    %v307 = vpop.f32.mrf.mxu0
    %v308 = vadd.f32 %v288, %v307
    %309 = vdwg.mxu0
    %310 = vmatpush.xpose.msra.mxu0 %v188
    %311 = vmatpush.xpose.msra.mxu0 %v185
    %312 = vmatpush.xpose.msra.mxu0 %v182
    %313 = vmatpush.xpose.msra.mxu0 %v179
    %314 = vmatpush.xpose.msra.mxu0 %v176
    %315 = vmatpush.xpose.msra.mxu0 %v173
    %316 = vmatpush.xpose.msra.mxu0 %v170
    %317 = vmatpush.xpose.msra.mxu0 %v167
    %318 = vmatpush.xpose.msra.mxu0 %v164
    %319 = vmatpush.xpose.msra.mxu0 %v161
    %320 = vmatpush.xpose.msra.mxu0 %v158
    %321 = vmatpush.xpose.msra.mxu0 %v155
    %322 = vmatpush.xpose.msra.mxu0 %v152
    %323 = vmatpush.xpose.msra.mxu0 %v149
    %324 = vmatpush.xpose.msra.mxu0 %v146
    %325 = vmatpush.xpose.msra.mxu0 %v143
    %326 = vmatmul.f32.gmra.mxu0 %v140
    %v327 = vpop.f32.mrf.mxu0
    %v328 = vadd.f32 %v308, %v327
    %329 = vdwg.mxu0
    %330 = vst [vmem:[#allocation2] sm:$0xff] %v328
    // Predicated region
    $region14: #{logistic_regression_forward.1} parent=1 // pred_check
      _
    $region15: #{logistic_regression_forward.1} parent=1 // pred_check_branch
      %332 = sbr.rel (0) target = $region17
    $region16: #{logistic_regression_forward.1} parent=1 // pred_region
      %334 = vsyncadd [#allocation3], 0
      %s336 = sshll.u32 [#allocation2], 4
      %s337 = int_to_ptr.vmem [resolvable:$true] %s336
      %s338 = sshll.u32 %s3, 4
      %s339 = int_to_ptr.hbm [resolvable:$true] %s338
      %341 = dma.vmem_to_hbm [thread:$0]  %s337, 128, %s339, [#allocation3]
    $region17: #{logistic_regression_forward.1} parent=1 // pred_fallthru
      _
    // Predicated region
    $region18: #{logistic_regression_forward.1} parent=1 // pred_check
      _
    $region19: #{logistic_regression_forward.1} parent=1 // pred_check_branch
      %343 = sbr.rel (0) target = $region21
    $region20: #{logistic_regression_forward.1} parent=1 // pred_region
      %345 = dma.done [#allocation3], 128
    $region21: #{logistic_regression_forward.1} parent=1 // pred_fallthru
      _
    %346 = vsyncpa [#allocation3], 1

</llo_original>
